<compile_context>
chip_gen: v7x
topology: tpu7x:2x2x1
jax: 0.10.0
libtpu: 0.0.40
codegen_flags: <defaults>
</compile_context>

<pallas_src>
import functools

import jax
import jax.numpy as jnp
import numpy as np
from jax import lax
from jax.experimental import pallas as pl
from jax.experimental.pallas import tpu as pltpu


def _round_up(x: int, m: int) -> int:
    return (x + m - 1) // m * m


# ----------------------------------------------------------------------------
# Kernel: prob tile = sigmoid(logits_tile) @ pm_norm_T, padded label columns
# masked to -1e30 so they can never win top-k.
#   logits_ref: (tile_m, T_pad)   pm_ref: (T_pad, L_pad)   out_ref: (tile_m, L_pad)
# pm_ref uses a constant index_map so the normalized positive map stays
# resident in VMEM across grid steps.
# ----------------------------------------------------------------------------
def _prob_to_label_kernel(logits_ref, pm_ref, out_ref, *, valid_labels):
    # sigmoid in f32 (v5e has no bf16 EUP); MXU inputs in pm's dtype (bf16/f32).
    p = jax.nn.sigmoid(logits_ref[...].astype(jnp.float32)).astype(pm_ref.dtype)
    acc = jnp.dot(p, pm_ref[...], preferred_element_type=jnp.float32)
    if valid_labels < out_ref.shape[-1]:
        col = lax.broadcasted_iota(jnp.int32, acc.shape, 1)
        acc = jnp.where(col < valid_labels, acc, jnp.float32(-1e30))
    out_ref[...] = acc.astype(out_ref.dtype)


# ----------------------------------------------------------------------------
# Wrapper (PostProcess.forward)
# ----------------------------------------------------------------------------
@functools.partial(jax.jit, static_argnames=("num_select", "use_bf16_prob"))
def post_process(out_logits, out_bbox, target_sizes, pos_map,
                 num_select=100, use_bf16_prob=False):
    B, Q, T = out_logits.shape
    L = pos_map.shape[0]
    M = B * Q

    compute_dtype = (jnp.bfloat16 if out_logits.dtype == jnp.bfloat16
                     else jnp.float32)
    # bf16 prob halves the dominant output HBM stream; may perturb top-k near ties.
    prob_dtype = jnp.bfloat16 if use_bf16_prob else jnp.float32

    # --- constant prep hoisted out of the kernel (done once, plain JAX) ---
    row_sum = pos_map.sum(-1, keepdims=True).astype(jnp.float32)
    pm_norm = pos_map.astype(jnp.float32) / jnp.where(row_sum == 0.0, 1.0, row_sum)

    L_pad = _round_up(L, 128)                       # lane-dense output stores
    T_pad = T if T % 128 == 0 else _round_up(T, 128)

    # Positive map (T_pad, L_pad): tiny, built once, zero-padded.
    pm_t = pm_norm.T.astype(compute_dtype)
    if (T_pad, L_pad) != (T, L):
        pm_pad = jnp.zeros((T_pad, L_pad), compute_dtype).at[:T, :L].set(pm_t)
    else:
        pm_pad = pm_t

    # Logits fed straight through — no M padding, no extra HBM pass.
    logits_2d = out_logits.reshape(M, T).astype(compute_dtype)
    if T_pad != T:   # real GroundingDINO uses T=256 -> never taken
        logits_2d = jnp.pad(logits_2d, ((0, 0), (0, T_pad - T)))

    # --- tile sizing: big tiles to amortize grid-step overhead, >=2 steps
    #     once M > 512 so v7x's two TensorCores split the parallel axis. ---
    sub = 16 if compute_dtype == jnp.bfloat16 else 8
    M_aligned = _round_up(M, sub)
    if M_aligned <= 512:
        tile_m = M_aligned
    else:
        tile_m = min(2048, max(512, _round_up(pl.cdiv(M, 2), 256)))
        tile_m = _round_up(tile_m, sub)
    grid_m = pl.cdiv(M, tile_m)

    prob2d = pl.pallas_call(
        functools.partial(_prob_to_label_kernel, valid_labels=L),
        out_shape=jax.ShapeDtypeStruct((M, L_pad), prob_dtype),
        grid=(grid_m,),
        in_specs=[
            pl.BlockSpec((tile_m, T_pad), lambda m: (m, 0)),
            pl.BlockSpec((T_pad, L_pad), lambda m: (0, 0)),   # resident constant
        ],
        out_specs=pl.BlockSpec((tile_m, L_pad), lambda m: (m, 0)),
        compiler_params=pltpu.CompilerParams(
            dimension_semantics=("parallel",)),
    )(logits_2d, pm_pad)

    prob = prob2d.reshape(B, Q, L_pad)   # free row-major reshape

    # --- top-k over flattened (query, label_pad) space ---
    # TODO(synk): sorted top-k and the data-dependent gather stay in plain JAX
    # (lax.top_k / take_along_axis); no clean Pallas TPU equivalent.
    k1 = min(num_select, L)
    if Q * L_pad > 8192 and 2 * k1 <= L_pad:
        # Two-stage: per-query top-k1, then global top-num_select over candidates.
        v1, i1 = lax.top_k(prob, k1)                          # (B, Q, k1)
        scores, i2 = lax.top_k(v1.reshape(B, Q * k1), num_select)
        topk_boxes = i2 // k1
        labels = jnp.take_along_axis(i1.reshape(B, Q * k1), i2, axis=1)
    else:
        scores, idx = lax.top_k(prob.reshape(B, Q * L_pad), num_select)
        topk_boxes = idx // L_pad
        labels = idx % L_pad
    scores = scores.astype(jnp.float32)

    # --- gather only num_select boxes, then cxcywh->xyxy + scale (plain JAX) ---
    g = jnp.take_along_axis(out_bbox.astype(jnp.float32),
                            topk_boxes[:, :, None], axis=1)        # (B, K, 4)
    cx, cy, w, h = g[..., 0], g[..., 1], g[..., 2], g[..., 3]
    xyxy = jnp.stack([cx - 0.5 * w, cy - 0.5 * h,
                      cx + 0.5 * w, cy + 0.5 * h], axis=-1)
    img_h = target_sizes[:, 0].astype(jnp.float32)
    img_w = target_sizes[:, 1].astype(jnp.float32)
    scale_fct = jnp.stack([img_w, img_h, img_w, img_h], axis=1)     # (B, 4)
    boxes = xyxy * scale_fct[:, None, :]

    # TODO(synk): optional NMS branch (nms_iou_threshold > 0) not implemented
    # (data-dependent, host-side in the original).
    return scores, labels, boxes


# Pure JAX reference (mirrors the PyTorch forward) for a correctness check.
def post_process_ref(out_logits, out_bbox, target_sizes, pos_map, num_select=100):
    B, Q, T = out_logits.shape
    L = pos_map.shape[0]
    prob_to_token = jax.nn.sigmoid(out_logits.astype(jnp.float32))
    row_sum = pos_map.sum(-1, keepdims=True)
    pm = pos_map / jnp.where(row_sum == 0.0, 1.0, row_sum)
    prob = prob_to_token @ pm.T
    scores, idx = lax.top_k(prob.reshape(B, Q * L), num_select)
    topk_boxes = idx // L
    labels = idx % L
    cx, cy, w, h = [out_bbox[..., i] for i in range(4)]
    xyxy = jnp.stack([cx - 0.5 * w, cy - 0.5 * h, cx + 0.5 * w, cy + 0.5 * h], -1)
    gathered = jnp.take_along_axis(xyxy, topk_boxes[:, :, None], axis=1)
    img_h, img_w = target_sizes[:, 0], target_sizes[:, 1]
    scale = jnp.stack([img_w, img_h, img_w, img_h], 1).astype(jnp.float32)
    gathered = gathered * scale[:, None, :]
    return scores, labels, gathered


if __name__ == "__main__":
    # Small synthetic shapes consistent with the module's forward.
    B, Q, T, L = 2, 16, 128, 8       # batch, queries, text tokens, labels
    NUM_SELECT = 100                 # <= Q * L = 128 (PyTorch default is 100)

    key = jax.random.PRNGKey(0)
    k_logits, k_bbox = jax.random.split(key)

    out_logits = jax.random.normal(k_logits, (B, Q, T), dtype=jnp.float32)
    out_bbox = jax.random.uniform(k_bbox, (B, Q, 4), dtype=jnp.float32,
                                  minval=0.05, maxval=0.95)       # cxcywh in [0,1]
    target_sizes = jnp.array([[480.0, 640.0], [320.0, 416.0]],
                             dtype=jnp.float32)                   # (h, w)

    # Deterministic synthetic positive map [L, T]: label j owns a contiguous
    # 4-token span; last label left all-zero to exercise the zero-sum branch.
    pm_np = np.zeros((L, T), dtype=np.float32)
    for j in range(L - 1):
        pm_np[j, j * 8: j * 8 + 4] = 1.0
    pos_map = jnp.asarray(pm_np)

    scores, labels, boxes = post_process(
        out_logits, out_bbox, target_sizes, pos_map, num_select=NUM_SELECT)
    jax.block_until_ready((scores, labels, boxes))

    s_ref, l_ref, b_ref = post_process_ref(
        out_logits, out_bbox, target_sizes, pos_map, num_select=NUM_SELECT)
    np.testing.assert_allclose(np.asarray(scores), np.asarray(s_ref),
                               rtol=1e-5, atol=1e-5)
    np.testing.assert_array_equal(np.asarray(labels), np.asarray(l_ref))
    np.testing.assert_allclose(np.asarray(boxes), np.asarray(b_ref),
                               rtol=1e-5, atol=1e-4)

    print("KERNEL_OK")
</pallas_src>

<mosaic_0001>
module attributes {stable_mosaic.version = 11 : i64} {
  func.func @_prob_to_label_kernel(%arg0: i32, %arg1: memref<32x128xf32, #tpu.memory_space<vmem>>, %arg2: memref<128x128xf32, #tpu.memory_space<vmem>>, %arg3: memref<32x128xf32, #tpu.memory_space<vmem>>) attributes {dimension_semantics = [#tpu.dimension_semantics<parallel>], iteration_bounds = array<i64: 1>, scalar_prefetch = 0 : i64, scratch_operands = 0 : i64, tpu.core_type = #tpu.core_type<tc>, window_params = [{transform_indices = @transform_0, window_bounds = array<i64: 32, 128>}, {pipeline_mode = #tpu.pipeline_mode<synchronous>, transform_indices = @transform_1, window_bounds = array<i64: 128, 128>}, {transform_indices = @transform_2, window_bounds = array<i64: 32, 128>}]} {
    %c0 = arith.constant 0 : index
    %c0_0 = arith.constant 0 : index
    %0 = vector.load %arg1[%c0, %c0_0] : memref<32x128xf32, #tpu.memory_space<vmem>>, vector<32x128xf32>
    %1 = arith.negf %0 : vector<32x128xf32>
    %2 = math.exp %1 : vector<32x128xf32>
    %cst = arith.constant 1.000000e+00 : f32
    %3 = vector.broadcast %cst : f32 to vector<32x128xf32>
    %4 = arith.addf %3, %2 : vector<32x128xf32>
    %5 = arith.divf %3, %4 : vector<32x128xf32>
    %c0_1 = arith.constant 0 : index
    %c0_2 = arith.constant 0 : index
    %6 = vector.load %arg2[%c0_1, %c0_2] : memref<128x128xf32, #tpu.memory_space<vmem>>, vector<128x128xf32>
    %cst_3 = arith.constant dense<0.000000e+00> : vector<32x128xf32>
    %7 = tpu.matmul %5, %6, %cst_3 {dimension_numbers = #tpu.dot_dimension_numbers<[1], [0], [0], [1], [0, 0, 1, 1], [], []>} : vector<32x128xf32>, vector<128x128xf32>, vector<32x128xf32> -> vector<32x128xf32>
    %8 = tpu.iota {dimensions = array<i32: 1>} : vector<32x128xi32>
    %c8_i32 = arith.constant 8 : i32
    %9 = vector.broadcast %c8_i32 : i32 to vector<32x128xi32>
    %10 = arith.cmpi slt, %8, %9 : vector<32x128xi32>
    %cst_4 = arith.constant -1.000000e+30 : f32
    %11 = vector.broadcast %cst_4 : f32 to vector<32x128xf32>
    %12 = arith.select %10, %7, %11 : vector<32x128xi1>, vector<32x128xf32>
    %c0_5 = arith.constant 0 : index
    %c0_6 = arith.constant 0 : index
    %13 = vector.load %arg3[%c0_5, %c0_6] : memref<32x128xf32, #tpu.memory_space<vmem>>, vector<32x128xf32>
    tpu.vector_store %arg3[%c0_5, %c0_6], %12 {strides = array<i32>} : memref<32x128xf32, #tpu.memory_space<vmem>>, vector<32x128xf32>,
    return
  }
  func.func @transform_0(%arg0: i32) -> (i32, i32) {
    %c0_i32 = arith.constant 0 : i32
    %c0_i32_0 = arith.constant 0 : i32
    return %arg0, %c0_i32 : i32, i32
  }
  func.func @transform_1(%arg0: i32) -> (i32, i32) {
    %c0_i32 = arith.constant 0 : i32
    %c0_i32_0 = arith.constant 0 : i32
    %c0_i32_1 = arith.constant 0 : i32
    return %c0_i32, %c0_i32_0 : i32, i32
  }
  func.func @transform_2(%arg0: i32) -> (i32, i32) {
    %c0_i32 = arith.constant 0 : i32
    %c0_i32_0 = arith.constant 0 : i32
    return %arg0, %c0_i32 : i32, i32
  }
}

</mosaic_0001>

<llo_original>
// kernel: post_process.1
$region0: #{post_process.1}
  #allocation0 [shape = 'u32[]', space=smem, size = 0x4, offset = 0x4, fixed_abs, tag = 'smem constant byte address 0x4 - core index']
  #allocation1 [shape = 'u32[144,128]{1,0:T(1,128)}', space=vmem, size = 0x12000, scoped, tag = 'internal scratch']
  %s0 = inlined_call_operand.vmem [shape: f32[32,128], index: 0, kind: input, shape index: {}]
  %s1 = inlined_call_operand.vmem [shape: f32[128,128], index: 1, kind: input, shape index: {}]
  %s2 = inlined_call_operand.vmem [shape: f32[32,128], index: 2, kind: output, shape index: {}]
  %s3 = sld [smem:[#allocation0]]
  $region18: #{post_process.1} parent=0
    _
  %s5 = ssub.s32 1, %s3
  %s6 = scalar_select 0, %s5, %s3
  // Predicated region
  $region2: #{post_process.1} parent=0 // pred_check
    _
  $region3: #{post_process.1} parent=0 // pred_check_branch
    %8 = sbr.rel (0) target = $region5
  $region4: #{post_process.1} parent=0 // pred_region
    _
  $region5: #{post_process.1} parent=0 // pred_fallthru
    _
  // Predicated region
  $region6: #{post_process.1} parent=0 // pred_check
    _
  $region7: #{post_process.1} parent=0 // pred_check_branch
    %10 = sbr.rel (0) target = $region9
  $region8: #{post_process.1} parent=0 // pred_region
    _
  $region9: #{post_process.1} parent=0 // pred_fallthru
    _
  %v11 = vld [vmem:[%s0] sm:$0xff]
  %v12 = vld [vmem:[%s0 + $0x8] sm:$0xff]
  %v13 = vld [vmem:[%s0 + $0x10] sm:$0xff]
  %v14 = vld [vmem:[%s0 + $0x18] sm:$0xff]
  %v15 = vxor.u32 %v11, 2147483648
  %v16 = vxor.u32 %v12, 2147483648
  %v17 = vxor.u32 %v13, 2147483648
  %v18 = vxor.u32 %v14, 2147483648
  %v19 = vmul.f32 %v15, 1.442695
  %v20 = vpow.pop %v19
  %v21 = vmul.f32 %v16, 1.442695
  %v22 = vpow.pop %v21
  %v23 = vmul.f32 %v17, 1.442695
  %v24 = vpow.pop %v23
  %v25 = vmul.f32 %v18, 1.442695
  %v26 = vpow.pop %v25
  %v27 = vadd.f32 %v20, 1.0
  %v28 = vadd.f32 %v22, 1.0
  %v29 = vadd.f32 %v24, 1.0
  %v30 = vadd.f32 %v26, 1.0
  %v31 = vrcp.pop %v27
  %v32 = vmul.f32 1.0, %v31
  %v33 = vrcp.pop %v28
  %v34 = vmul.f32 1.0, %v33
  %v35 = vrcp.pop %v29
  %v36 = vmul.f32 1.0, %v35
  %v37 = vrcp.pop %v30
  %v38 = vmul.f32 1.0, %v37
  %v39 = vld [vmem:[%s1] sm:$0xff]
  %v40 = vld [vmem:[%s1 + $0x8] sm:$0xff]
  %v41 = vld [vmem:[%s1 + $0x10] sm:$0xff]
  %v42 = vld [vmem:[%s1 + $0x18] sm:$0xff]
  %v43 = vld [vmem:[%s1 + $0x20] sm:$0xff]
  %v44 = vld [vmem:[%s1 + $0x28] sm:$0xff]
  %v45 = vld [vmem:[%s1 + $0x30] sm:$0xff]
  %v46 = vld [vmem:[%s1 + $0x38] sm:$0xff]
  %v47 = vld [vmem:[%s1 + $0x40] sm:$0xff]
  %v48 = vld [vmem:[%s1 + $0x48] sm:$0xff]
  %v49 = vld [vmem:[%s1 + $0x50] sm:$0xff]
  %v50 = vld [vmem:[%s1 + $0x58] sm:$0xff]
  %v51 = vld [vmem:[%s1 + $0x60] sm:$0xff]
  %v52 = vld [vmem:[%s1 + $0x68] sm:$0xff]
  %v53 = vld [vmem:[%s1 + $0x70] sm:$0xff]
  %v54 = vld [vmem:[%s1 + $0x78] sm:$0xff]
  %55 = vmatprep.subr.mxu0 0.0
  %56 = vmatpush1.msra.mxu0 %v39
  %57 = vmatprep.subr.mxu0 0.0
  %58 = vmatpush1.msra.mxu0 %v40
  %59 = vmatprep.subr.mxu0 0.0
  %60 = vmatpush1.msra.mxu0 %v41
  %61 = vmatprep.subr.mxu0 0.0
  %62 = vmatpush1.msra.mxu0 %v42
  %63 = vmatprep.subr.mxu0 0.0
  %64 = vmatpush1.msra.mxu0 %v43
  %65 = vmatprep.subr.mxu0 0.0
  %66 = vmatpush1.msra.mxu0 %v44
  %67 = vmatprep.subr.mxu0 0.0
  %68 = vmatpush1.msra.mxu0 %v45
  %69 = vmatprep.subr.mxu0 0.0
  %70 = vmatpush1.msra.mxu0 %v46
  %71 = vmatprep.subr.mxu0 0.0
  %72 = vmatpush1.msra.mxu0 %v47
  %73 = vmatprep.subr.mxu0 0.0
  %74 = vmatpush1.msra.mxu0 %v48
  %75 = vmatprep.subr.mxu0 0.0
  %76 = vmatpush1.msra.mxu0 %v49
  %77 = vmatprep.subr.mxu0 0.0
  %78 = vmatpush1.msra.mxu0 %v50
  %79 = vmatprep.subr.mxu0 0.0
  %80 = vmatpush1.msra.mxu0 %v51
  %81 = vmatprep.subr.mxu0 0.0
  %82 = vmatpush1.msra.mxu0 %v52
  %83 = vmatprep.subr.mxu0 0.0
  %84 = vmatpush1.msra.mxu0 %v53
  %85 = vmatprep.subr.mxu0 0.0
  %86 = vmatpush1.msra.mxu0 %v54
  %87 = vmatprep.subr.mxu0 0.0
  %88 = vmatpush1.msra.mxu0 0.0
  %89 = vmatprep.subr.mxu0 0.0
  %90 = vmatpush1.msra.mxu0 0.0
  %91 = vmatprep.subr.mxu0 0.0
  %92 = vmatpush1.msra.mxu0 0.0
  %93 = vmatprep.subr.mxu0 0.0
  %94 = vmatpush1.msra.mxu0 0.0
  %95 = vmatprep.subr.mxu0 0.0
  %96 = vmatpush1.msra.mxu0 0.0
  %97 = vmatprep.subr.mxu0 0.0
  %98 = vmatpush1.msra.mxu0 0.0
  %99 = vmatprep.subr.mxu0 0.0
  %100 = vmatpush1.msra.mxu0 0.0
  %101 = vmatprep.subr.mxu0 0.0
  %102 = vmatpush1.msra.mxu0 0.0
  %103 = vmatprep.subr.mxu0 0.0
  %104 = vmatpush1.msra.mxu0 0.0
  %105 = vmatprep.subr.mxu0 0.0
  %106 = vmatpush1.msra.mxu0 0.0
  %107 = vmatprep.subr.mxu0 0.0
  %108 = vmatpush1.msra.mxu0 0.0
  %109 = vmatprep.subr.mxu0 0.0
  %110 = vmatpush1.msra.mxu0 0.0
  %111 = vmatprep.subr.mxu0 0.0
  %112 = vmatpush1.msra.mxu0 0.0
  %113 = vmatprep.subr.mxu0 0.0
  %114 = vmatpush1.msra.mxu0 0.0
  %115 = vmatprep.subr.mxu0 0.0
  %116 = vmatpush1.msra.mxu0 0.0
  %117 = vmatprep.subr.mxu0 0.0
  %118 = vmatpush1.msra.mxu0 0.0
  %119 = vmatprep.mubr.f32.mxu0 0.0
  %120 = vmatmul.mubr.f32.gmra.mrb[0].mxu0 %v32
  %v121 = vpop.f32.mrb[0].mxu0
  %v122 = vadd.f32 0.0, %v121
  %v123 = vpop.f32.mrb[0].mxu0
  %124 = vmatprep.mubr.f32.mxu0 0.0
  %125 = vmatmul.mubr.f32.gmra.mrb[0].mxu0 %v34
  %v126 = vpop.f32.mrb[0].mxu0
  %v127 = vadd.f32 0.0, %v126
  %v128 = vpop.f32.mrb[0].mxu0
  %129 = vmatprep.mubr.f32.mxu0 0.0
  %130 = vmatmul.mubr.f32.gmra.mrb[0].mxu0 %v36
  %v131 = vpop.f32.mrb[0].mxu0
  %v132 = vadd.f32 0.0, %v131
  %v133 = vpop.f32.mrb[0].mxu0
  %134 = vmatprep.mubr.f32.mxu0 0.0
  %135 = vmatmul.mubr.f32.gmra.mrb[0].mxu0 %v38
  %v136 = vpop.f32.mrb[0].mxu0
  %v137 = vadd.f32 0.0, %v136
  %v138 = vpop.f32.mrb[0].mxu0
  %139 = vdwg.mxu0
  %v140 = vlaneseq
  %v141 = vand.u32 %v140, 127
  %vm142 = vcmp.lt.s32.totalorder %v141, 8
  %v143 = vsel %vm142, %v122, -1e+30
  %v144 = vsel %vm142, %v127, -1e+30
  %v145 = vsel %vm142, %v132, -1e+30
  %v146 = vsel %vm142, %v137, -1e+30
  %147 = vst [vmem:[%s2] sm:$0xff] %v143
  %148 = vst [vmem:[%s2 + $0x8] sm:$0xff] %v144
  %149 = vst [vmem:[%s2 + $0x10] sm:$0xff] %v145
  %150 = vst [vmem:[%s2 + $0x18] sm:$0xff] %v146
  // Predicated region
  $region10: #{post_process.1} parent=0 // pred_check
    _
  $region11: #{post_process.1} parent=0 // pred_check_branch
    %152 = sbr.rel (0) target = $region13
  $region12: #{post_process.1} parent=0 // pred_region
    _
  $region13: #{post_process.1} parent=0 // pred_fallthru
    _
  // Predicated region
  $region14: #{post_process.1} parent=0 // pred_check
    _
  $region15: #{post_process.1} parent=0 // pred_check_branch
    %154 = sbr.rel (0) target = $region17
  $region16: #{post_process.1} parent=0 // pred_region
    _
  $region17: #{post_process.1} parent=0 // pred_fallthru
    _

</llo_original>
